<compile_context>
chip_gen: v5e
topology: v5e:2x2
jax: 0.10.0
libtpu: 0.0.40
codegen_flags: <defaults>
</compile_context>

<pallas_src>
import jax
import jax.numpy as jnp
from jax.experimental import pallas as pl
from jax.experimental.pallas import tpu as pltpu


# ---------------------------------------------------------------------------
# Kernel: one matmul + bias.  x:(Bblk, L)  w:(L, L)  b:(1, L)  ->  out:(Bblk, L)
# ---------------------------------------------------------------------------
def _fused_cross_attention_kernel(x_ref, w_ref, b_ref, out_ref):
    out_ref[...] = (
        jnp.dot(x_ref[...], w_ref[...], preferred_element_type=jnp.float32)
        + b_ref[...]
    ).astype(out_ref.dtype)


# ---------------------------------------------------------------------------
# One-time parameter prep (keep OUT of the hot path): fold the affine chain
#   y = (((x Wv^T + bv) Wiv^T + biv) Wo^T + bo) Wfc^T + bfc
# q/k/in_proj_q/in_proj_k and the 1/sqrt(H) scale do not affect the output
# because softmax over a single key is identically 1.
# ---------------------------------------------------------------------------
def fold_params(params):
    wv_t = params["wv"].T.astype(jnp.float32)     # (L, H)
    wiv_t = params["wiv"].T.astype(jnp.float32)   # (H, H)
    wo_t = params["wo"].T.astype(jnp.float32)     # (H, H)
    wfc_t = params["wfc"].T.astype(jnp.float32)   # (H, L)

    w_fused = wv_t @ wiv_t @ wo_t @ wfc_t         # (L, L)

    b = params["bv"].astype(jnp.float32) @ wiv_t + params["biv"].astype(jnp.float32)
    b = b @ wo_t + params["bo"].astype(jnp.float32)
    b = b @ wfc_t + params["bfc"].astype(jnp.float32)
    b_fused = b[None, :]                          # (1, L): 2-D so it tiles in VMEM

    return w_fused, b_fused


# ---------------------------------------------------------------------------
# Wrapper: gridless for small B, tiled over B ("parallel") for large B.
# ---------------------------------------------------------------------------
def cross_attention_pallas(latent_vector, w_fused, b_fused, *, block_b=2048):
    latent_vector = latent_vector.astype(jnp.float32)
    B, latent_dim = latent_vector.shape
    out_shape = jax.ShapeDtypeStruct((B, latent_dim), jnp.float32)

    # Advisory hint for the XLA scheduler around the custom call.
    cost = pl.CostEstimate(
        flops=2 * B * latent_dim * latent_dim,
        transcendentals=0,
        bytes_accessed=4 * (2 * B * latent_dim + latent_dim * latent_dim + latent_dim),
    )

    if B <= block_b:
        # Single block, no grid / pipelining scaffolding.
        return pl.pallas_call(
            _fused_cross_attention_kernel,
            out_shape=out_shape,
            in_specs=[
                pl.BlockSpec(memory_space=pltpu.MemorySpace.VMEM),
                pl.BlockSpec(memory_space=pltpu.MemorySpace.VMEM),
                pl.BlockSpec(memory_space=pltpu.MemorySpace.VMEM),
            ],
            out_specs=pl.BlockSpec(memory_space=pltpu.MemorySpace.VMEM),
            cost_estimate=cost,
        )(latent_vector, w_fused, b_fused)

    # Large batch: tile B (sublane-aligned block); weights/bias stay resident
    # (index_map returns the same block every step -> no re-DMA).
    block_b = max(8, (block_b // 8) * 8)
    grid = (pl.cdiv(B, block_b),)
    return pl.pallas_call(
        _fused_cross_attention_kernel,
        out_shape=out_shape,
        grid=grid,
        in_specs=[
            pl.BlockSpec((block_b, latent_dim), lambda i: (i, 0)),
            pl.BlockSpec(w_fused.shape, lambda i: (0, 0)),
            pl.BlockSpec(b_fused.shape, lambda i: (0, 0)),
        ],
        out_specs=pl.BlockSpec((block_b, latent_dim), lambda i: (i, 0)),
        compiler_params=pltpu.CompilerParams(
            dimension_semantics=("parallel",),   # shard the B axis across cores
        ),
        cost_estimate=cost,
    )(latent_vector, w_fused, b_fused)


# ---------------------------------------------------------------------------
# Pure-JAX reference mirroring the full PyTorch forward (including the softmax).
# ---------------------------------------------------------------------------
def cross_attention_reference(latent_vector, command_embedding, params):
    q = command_embedding @ params["wq"].T + params["bq"]
    k = latent_vector @ params["wk"].T + params["bk"]
    v = latent_vector @ params["wv"].T + params["bv"]
    q2 = q @ params["wiq"].T + params["biq"]
    k2 = k @ params["wik"].T + params["bik"]
    v2 = v @ params["wiv"].T + params["biv"]
    hidden_dim = q2.shape[-1]
    scores = jnp.sum(q2 * k2, axis=-1, keepdims=True) / jnp.sqrt(jnp.float32(hidden_dim))
    weights = jax.nn.softmax(scores, axis=-1)     # single key -> exactly 1.0
    attn = weights * v2
    o = attn @ params["wo"].T + params["bo"]
    return o @ params["wfc"].T + params["bfc"]


def make_params(key, latent_dim, command_dim, hidden_dim):
    """Deterministic synthetic parameters with the same shapes as the PyTorch module."""
    keys = jax.random.split(key, 16)
    s = 0.1

    def w(k, shape):
        return s * jax.random.normal(k, shape, dtype=jnp.float32)

    return {
        # nn.Linear(command_dim, hidden_dim)
        "wq": w(keys[0], (hidden_dim, command_dim)), "bq": w(keys[1], (hidden_dim,)),
        # nn.Linear(latent_dim, hidden_dim) x2
        "wk": w(keys[2], (hidden_dim, latent_dim)), "bk": w(keys[3], (hidden_dim,)),
        "wv": w(keys[4], (hidden_dim, latent_dim)), "bv": w(keys[5], (hidden_dim,)),
        # nn.MultiheadAttention in_proj (3H, H) split into q/k/v slices
        "wiq": w(keys[6], (hidden_dim, hidden_dim)), "biq": w(keys[7], (hidden_dim,)),
        "wik": w(keys[8], (hidden_dim, hidden_dim)), "bik": w(keys[9], (hidden_dim,)),
        "wiv": w(keys[10], (hidden_dim, hidden_dim)), "biv": w(keys[11], (hidden_dim,)),
        # nn.MultiheadAttention out_proj
        "wo": w(keys[12], (hidden_dim, hidden_dim)), "bo": w(keys[13], (hidden_dim,)),
        # nn.Linear(hidden_dim, latent_dim)
        "wfc": w(keys[14], (latent_dim, hidden_dim)), "bfc": w(keys[15], (latent_dim,)),
    }


if __name__ == "__main__":
    latent_dim, command_dim, hidden_dim = 16, 8, 32

    root = jax.random.PRNGKey(0)
    k_lat, k_cmd, k_par, k_lat2 = jax.random.split(root, 4)

    params = make_params(k_par, latent_dim, command_dim, hidden_dim)
    w_fused, b_fused = fold_params(params)        # one-time prep, not per call

    # ---- small batch: gridless single-block path --------------------------
    B = 8
    latent = jax.random.normal(k_lat, (B, latent_dim), dtype=jnp.float32)
    cmd = jax.random.normal(k_cmd, (B, command_dim), dtype=jnp.float32)

    out = jax.block_until_ready(cross_attention_pallas(latent, w_fused, b_fused))
    ref = cross_attention_reference(latent, cmd, params)
    assert out.shape == (B, latent_dim)
    assert jnp.allclose(out, ref, atol=1e-4, rtol=1e-4), "mismatch vs. reference (small B)"

    # ---- larger batch: tiled-over-B parallel-grid path ---------------------
    B2 = 512
    latent2 = jax.random.normal(k_lat2, (B2, latent_dim), dtype=jnp.float32)
    cmd2 = jax.random.normal(k_cmd, (B2, command_dim), dtype=jnp.float32)

    out2 = jax.block_until_ready(
        cross_attention_pallas(latent2, w_fused, b_fused, block_b=256)
    )
    ref2 = cross_attention_reference(latent2, cmd2, params)
    assert out2.shape == (B2, latent_dim)
    assert jnp.allclose(out2, ref2, atol=1e-4, rtol=1e-4), "mismatch vs. reference (tiled B)"

    print("KERNEL_OK")
</pallas_src>

<mosaic_0001>
module attributes {stable_mosaic.version = 11 : i64} {
  func.func @_fused_cross_attention_kernel(%arg0: memref<8x16xf32, #tpu.memory_space<vmem>>, %arg1: memref<16x16xf32, #tpu.memory_space<vmem>>, %arg2: memref<1x16xf32, #tpu.memory_space<vmem>>, %arg3: memref<8x16xf32, #tpu.memory_space<vmem>>) attributes {dimension_semantics = [], scalar_prefetch = 0 : i64, scratch_operands = 0 : i64, tpu.core_type = #tpu.core_type<tc>} {
    %c0 = arith.constant 0 : index
    %c0_0 = arith.constant 0 : index
    %0 = vector.load %arg0[%c0, %c0_0] : memref<8x16xf32, #tpu.memory_space<vmem>>, vector<8x16xf32>
    %c0_1 = arith.constant 0 : index
    %c0_2 = arith.constant 0 : index
    %1 = vector.load %arg1[%c0_1, %c0_2] : memref<16x16xf32, #tpu.memory_space<vmem>>, vector<16x16xf32>
    %cst = arith.constant dense<0.000000e+00> : vector<8x16xf32>
    %2 = tpu.matmul %0, %1, %cst {dimension_numbers = #tpu.dot_dimension_numbers<[1], [0], [0], [1], [0, 0, 1, 1], [], []>} : vector<8x16xf32>, vector<16x16xf32>, vector<8x16xf32> -> vector<8x16xf32>
    %c0_3 = arith.constant 0 : index
    %c0_4 = arith.constant 0 : index
    %3 = vector.load %arg2[%c0_3, %c0_4] : memref<1x16xf32, #tpu.memory_space<vmem>>, vector<1x16xf32>
    %4 = vector.broadcast %3 : vector<1x16xf32> to vector<8x16xf32>
    %5 = arith.addf %2, %4 : vector<8x16xf32>
    %c0_5 = arith.constant 0 : index
    %c0_6 = arith.constant 0 : index
    %6 = vector.load %arg3[%c0_5, %c0_6] : memref<8x16xf32, #tpu.memory_space<vmem>>, vector<8x16xf32>
    tpu.vector_store %arg3[%c0_5, %c0_6], %5 {strides = array<i32>} : memref<8x16xf32, #tpu.memory_space<vmem>>, vector<8x16xf32>,
    return
  }
}

</mosaic_0001>

<llo_original>
// kernel: tpu_custom_call.1
$region0: #{tpu_custom_call.1}
  #allocation0 [shape = 'u32[]', space=smem, size = 0x4, offset = 0x4, fixed_abs, tag = 'smem constant byte address 0x4 - core index']
  #allocation1 [shape = 'u32[72,128]{1,0:T(1,128)}', space=vmem, size = 0x9000, scoped, tag = 'internal scratch']
  %s0 = inlined_call_operand.hbm [shape: f32[8,16], index: 0, kind: input, shape index: {}]
  %s1 = inlined_call_operand.hbm [shape: f32[16,16], index: 1, kind: input, shape index: {}]
  %s2 = inlined_call_operand.vmem [shape: f32[1,16], index: 2, kind: input, shape index: {}]
  %s3 = inlined_call_operand.hbm [shape: f32[8,16], index: 3, kind: output, shape index: {}]
  %s4 = sld [smem:[#allocation0]]
  $region30: #{tpu_custom_call.1} parent=0
    _
  %s6 = ssub.s32 1, %s4
  %s7 = scalar_select 0, %s6, %s4
  $region1: #{tpu_custom_call.1} parent=0
    #allocation2 [shape = 'u8[4096]{0}', space=vmem, size = 0x1000, scoped, tag = 'input window, operand 0, single buffered']
    #allocation3 [shape = 's32[1]{0}', space=sflag, size = 0x4, scoped, tag = 'scoped memory for tpu_custom_call.1']
    #allocation4 [shape = 's32[1]{0}', space=sflag, size = 0x4, scoped, tag = 'scoped memory for tpu_custom_call.1']
    #allocation5 [shape = 'u8[8192]{0}', space=vmem, size = 0x2000, scoped, tag = 'input window, operand 1, single buffered']
    #allocation6 [shape = 's32[1]{0}', space=sflag, size = 0x4, scoped, tag = 'scoped memory for tpu_custom_call.1']
    #allocation7 [shape = 'u8[4096]{0}', space=vmem, size = 0x1000, scoped, tag = 'output window, operand 0, single buffered']
    %8 = vsyncpa [#allocation3], 0
    %9 = vsyncpa [#allocation6], 0
    %10 = vsyncpa [#allocation4], 0
    // Predicated region
    $region2: #{tpu_custom_call.1} parent=1 // pred_check
      _
    $region3: #{tpu_custom_call.1} parent=1 // pred_check_branch
      %12 = sbr.rel (0) target = $region5
    $region4: #{tpu_custom_call.1} parent=1 // pred_region
      %14 = vsyncadd [#allocation3], 0
      %s16 = sshll.u32 %s0, 4
      %s17 = int_to_ptr.hbm [resolvable:$true] %s16
      %s18 = sshll.u32 [#allocation2], 4
      %s19 = int_to_ptr.vmem [resolvable:$true] %s18
      %21 = dma.hbm_to_vmem [thread:$0]  %s17, 128, %s19, [#allocation3]
    $region5: #{tpu_custom_call.1} parent=1 // pred_fallthru
      _
    // Predicated region
    $region6: #{tpu_custom_call.1} parent=1 // pred_check
      _
    $region7: #{tpu_custom_call.1} parent=1 // pred_check_branch
      %23 = sbr.rel (0) target = $region9
    $region8: #{tpu_custom_call.1} parent=1 // pred_region
      %25 = vsyncadd [#allocation6], 0
      %s26 = sshll.u32 %s1, 4
      %s27 = int_to_ptr.hbm [resolvable:$true] %s26
      %s28 = sshll.u32 [#allocation5], 4
      %s29 = int_to_ptr.vmem [resolvable:$true] %s28
      %34 = dma.hbm_to_vmem [thread:$0]  %s27, 256, %s29, [#allocation6], 128, 128, 8
    $region9: #{tpu_custom_call.1} parent=1 // pred_fallthru
      _
    // Predicated region
    $region10: #{tpu_custom_call.1} parent=1 // pred_check
      _
    $region11: #{tpu_custom_call.1} parent=1 // pred_check_branch
      %36 = sbr.rel (0) target = $region13
    $region12: #{tpu_custom_call.1} parent=1 // pred_region
      _
    $region13: #{tpu_custom_call.1} parent=1 // pred_fallthru
      _
    // Predicated region
    $region14: #{tpu_custom_call.1} parent=1 // pred_check
      _
    $region15: #{tpu_custom_call.1} parent=1 // pred_check_branch
      %38 = sbr.rel (0) target = $region17
    $region16: #{tpu_custom_call.1} parent=1 // pred_region
      %40 = dma.done [#allocation3], 128
    $region17: #{tpu_custom_call.1} parent=1 // pred_fallthru
      _
    // Predicated region
    $region18: #{tpu_custom_call.1} parent=1 // pred_check
      _
    $region19: #{tpu_custom_call.1} parent=1 // pred_check_branch
      %42 = sbr.rel (0) target = $region21
    $region20: #{tpu_custom_call.1} parent=1 // pred_region
      %44 = dma.done [#allocation6], 256
    $region21: #{tpu_custom_call.1} parent=1 // pred_fallthru
      _
    %v45 = vld [vmem:[#allocation2] sm:$0xff]
    %v46 = vld [vmem:[#allocation5] sm:$0xff]
    %v47 = vld [vmem:[#allocation5 + $0x8] sm:$0xff]
    %v48 = vld [vmem:[%s2] sm:$0x1]
    %v50 = vperm.slane %v48, 0
    %vm52 = vcmask 130048
    %v54 = vsel %vm52, %v45, 0
    %56 = vmatpush.msra.mxu0 0.0
    %57 = vmatpush.msra.mxu0 0.0
    %58 = vmatpush.msra.mxu0 0.0
    %59 = vmatpush.msra.mxu0 0.0
    %60 = vmatpush.msra.mxu0 0.0
    %61 = vmatpush.msra.mxu0 0.0
    %62 = vmatpush.msra.mxu0 0.0
    %63 = vmatpush.msra.mxu0 0.0
    %64 = vmatpush.msra.mxu0 0.0
    %65 = vmatpush.msra.mxu0 0.0
    %66 = vmatpush.msra.mxu0 0.0
    %67 = vmatpush.msra.mxu0 0.0
    %68 = vmatpush.msra.mxu0 0.0
    %69 = vmatpush.msra.mxu0 0.0
    %70 = vmatpush.msra.mxu0 %v47
    %71 = vmatpush.msra.mxu0 %v46
    %72 = vmatmul.f32.gmra.mxu0 %v54
    %v73 = vpop.f32.mrf.mxu0
    %v74 = vadd.f32 %v50, %v73
    %75 = vdwg.mxu0
    %76 = vst.msk [vmem:[#allocation7] sm:$0xff] %vm52, %v74
    // Predicated region
    $region22: #{tpu_custom_call.1} parent=1 // pred_check
      _
    $region23: #{tpu_custom_call.1} parent=1 // pred_check_branch
      %78 = sbr.rel (0) target = $region25
    $region24: #{tpu_custom_call.1} parent=1 // pred_region
      %80 = vsyncadd [#allocation4], 0
      %s82 = sshll.u32 [#allocation7], 4
      %s83 = int_to_ptr.vmem [resolvable:$true] %s82
      %s84 = sshll.u32 %s3, 4
      %s85 = int_to_ptr.hbm [resolvable:$true] %s84
      %87 = dma.vmem_to_hbm [thread:$0]  %s83, 128, %s85, [#allocation4]
    $region25: #{tpu_custom_call.1} parent=1 // pred_fallthru
      _
    // Predicated region
    $region26: #{tpu_custom_call.1} parent=1 // pred_check
      _
    $region27: #{tpu_custom_call.1} parent=1 // pred_check_branch
      %89 = sbr.rel (0) target = $region29
    $region28: #{tpu_custom_call.1} parent=1 // pred_region
      %91 = dma.done [#allocation4], 128
    $region29: #{tpu_custom_call.1} parent=1 // pred_fallthru
      _
    %92 = vsyncpa [#allocation3], 1
    %93 = vsyncpa [#allocation6], 1
    %94 = vsyncpa [#allocation4], 1

</llo_original>
